<compile_context>
chip_gen: v6e
topology: v6e:2x2x1
jax: 0.10.0
libtpu: 0.0.40
codegen_flags: <defaults>
</compile_context>

<pallas_src>
import jax
import jax.numpy as jnp
from jax import lax
from jax.experimental import pallas as pl
from jax.experimental.pallas import tpu as pltpu


def attention_kernel(h_ref, w_ref, b_ref, o_ref):
    """One batch tile per grid step.

    h_ref: (TB, S, D) bf16  -- batch tile of the input
    w_ref: (D, D)     bf16  -- PyTorch Linear weight (out_features, in_features)
    b_ref: (1, D)     f32
    o_ref: (TB, S)    f32   -- dense output block
    """
    tb, s, d = h_ref.shape
    h3 = h_ref[...]                                   # (TB, S, D) bf16
    w = w_ref[...]                                    # (D, D)    bf16
    bias = b_ref[...]                                 # (1, D)    f32

    # Linear y = h @ W.T + b.  Flatten (TB, S) -> rows so all TB*S rows feed a
    # single MXU matmul; contraction against W's in-features dim avoids any
    # physical transpose.  bf16 operands, f32 accumulation.
    x2 = lax.dot_general(
        h3.reshape(tb * s, d),
        w,
        dimension_numbers=(((1,), (1,)), ((), ())),
        preferred_element_type=jnp.float32,
    )                                                 # (TB*S, D) f32
    x2 = jnp.tanh(x2 + bias)                          # f32 (VPU + EUP)
    x = x2.reshape(tb, s, d)                          # (TB, S, D) f32

    # Numerically stable softmax over the sequence axis (axis=1 of (B, S, D)).
    m = jnp.max(x, axis=1, keepdims=True)             # (TB, 1, D)
    e = jnp.exp(x - m)                                # (TB, S, D)
    denom = jnp.sum(e, axis=1, keepdims=True)         # (TB, 1, D)
    sm = e * pl.reciprocal(denom, approx=True)        # EUP vrcp

    # Weighted sum over the feature (lane) axis -> dense (TB, S) store.
    hf = h3.astype(jnp.float32)
    o_ref[...] = jnp.sum(sm * hf, axis=2)


def _choose_batch_tile(B, S, D):
    """Pick TB: large enough to feed the MXU / amortize per-step cost,
    small enough that double-buffered blocks + f32 temporaries fit VMEM
    comfortably on every TPU generation."""
    budget = 20 << 20                               # conservative per-step budget
    per_batch_elem = S * D * (2 * 2 + 4 * 4)        # 2x bf16 h block + ~4 f32 temps
    max_tb = max(1, budget // per_batch_elem)
    # Aim for >= 256 MXU rows (TB*S) and >= 8 batch rows so the (TB, S)
    # output store is at least sublane-dense.
    target_tb = max(8, -(-256 // max(S, 1)))
    cap = min(max_tb, target_tb)
    if B <= cap:
        return B                                    # single / few full blocks
    best = 1
    for tb in range(cap, 0, -1):
        if B % tb == 0:
            if tb % 8 == 0:
                return tb                           # sublane-aligned output block
            if best == 1:
                best = tb
    return best


def attention_forward(h, w, b, *, batch_tile=None):
    B, S, D = h.shape

    # Stream h as bf16 (halves HBM DMA bytes) and pre-cast W to bf16 once so
    # the VMEM-resident copy needs no per-step cast.  Bias stays f32.
    # In a real pipeline the upstream producer should emit bf16 h directly.
    h_bf = h.astype(jnp.bfloat16)
    w_bf = w.astype(jnp.bfloat16)
    b2d = b.reshape(1, D).astype(jnp.float32)

    tb = batch_tile if batch_tile is not None else _choose_batch_tile(B, S, D)
    assert B % tb == 0
    grid = (B // tb,)

    # Explicit VMEM budget: double-buffered h blocks + resident W/bias +
    # double-buffered output blocks + f32 temporaries, with 2x headroom,
    # clamped to stay under v7x's 64 MiB physical VMEM.
    need = (2 * tb * S * D * 2        # h blocks (bf16, double-buffered)
            + D * D * 2 + D * 4       # resident W (bf16) + bias (f32)
            + 2 * tb * S * 4          # output blocks (f32, double-buffered)
            + 4 * tb * S * D * 4)     # in-kernel f32 temporaries
    vmem_limit = int(min(max(2 * need, 16 << 20), 48 << 20))

    out = pl.pallas_call(
        attention_kernel,
        out_shape=jax.ShapeDtypeStruct((B, S), jnp.float32),
        grid=grid,
        in_specs=[
            # h: one (TB, S, D) batch tile per step (double-buffer pipelined).
            pl.BlockSpec((tb, S, D), lambda i: (i, 0, 0)),
            # W, b: constant index_map -> stay resident in VMEM across steps.
            pl.BlockSpec((D, D), lambda i: (0, 0)),
            pl.BlockSpec((1, D), lambda i: (0, 0)),
        ],
        out_specs=pl.BlockSpec((tb, S), lambda i: (i, 0)),
        compiler_params=pltpu.CompilerParams(
            dimension_semantics=("parallel",),
            vmem_limit_bytes=vmem_limit,
        ),
    )(h_bf, w_bf, b2d)
    return out


def reference_forward(h, w, b):
    """Pure-JAX f32 reference mirroring the PyTorch module."""
    x = jnp.einsum("bsd,ed->bse", h, w) + b
    x = jnp.tanh(x)
    x = jax.nn.softmax(x, axis=1)
    return jnp.sum(x * h, axis=2)


if __name__ == "__main__":
    B, S, D = 2, 8, 32   # batch, seq, hidden dimension

    key = jax.random.PRNGKey(0)
    k_h, k_w, k_b = jax.random.split(key, 3)

    h = jax.random.normal(k_h, (B, S, D), dtype=jnp.float32)
    # PyTorch-style uniform init for Linear(dimension, dimension).
    bound = 1.0 / jnp.sqrt(jnp.float32(D))
    w = jax.random.uniform(k_w, (D, D), jnp.float32, -bound, bound)
    b = jax.random.uniform(k_b, (D,), jnp.float32, -bound, bound)

    out = jax.block_until_ready(attention_forward(h, w, b))

    ref = reference_forward(h, w, b)
    assert out.shape == (B, S)
    # Tolerance covers bf16 streaming of h/W (f32 accumulation) and the
    # approximate EUP reciprocal in the softmax denominator.
    assert jnp.allclose(out, ref, atol=5e-2, rtol=5e-2), "mismatch vs reference"

    print("KERNEL_OK")
</pallas_src>

<mosaic_0001>
module attributes {stable_mosaic.version = 11 : i64} {
  func.func @attention_kernel(%arg0: i32, %arg1: memref<2x8x32xbf16, #tpu.memory_space<vmem>>, %arg2: memref<32x32xbf16, #tpu.memory_space<vmem>>, %arg3: memref<1x32xf32, #tpu.memory_space<vmem>>, %arg4: memref<2x8xf32, #tpu.memory_space<vmem>>) attributes {dimension_semantics = [#tpu.dimension_semantics<parallel>], iteration_bounds = array<i64: 1>, scalar_prefetch = 0 : i64, scratch_operands = 0 : i64, tpu.core_type = #tpu.core_type<tc>, window_params = [{transform_indices = @transform_0, window_bounds = array<i64: 2, 8, 32>}, {pipeline_mode = #tpu.pipeline_mode<synchronous>, transform_indices = @transform_1, window_bounds = array<i64: 32, 32>}, {pipeline_mode = #tpu.pipeline_mode<synchronous>, transform_indices = @transform_2, window_bounds = array<i64: 1, 32>}, {transform_indices = @transform_3, window_bounds = array<i64: 2, 8>}]} {
    %c0 = arith.constant 0 : index
    %c0_0 = arith.constant 0 : index
    %c0_1 = arith.constant 0 : index
    %0 = vector.load %arg1[%c0, %c0_0, %c0_1] : memref<2x8x32xbf16, #tpu.memory_space<vmem>>, vector<2x8x32xbf16>
    %c0_2 = arith.constant 0 : index
    %c0_3 = arith.constant 0 : index
    %1 = vector.load %arg2[%c0_2, %c0_3] : memref<32x32xbf16, #tpu.memory_space<vmem>>, vector<32x32xbf16>
    %c0_4 = arith.constant 0 : index
    %c0_5 = arith.constant 0 : index
    %2 = vector.load %arg3[%c0_4, %c0_5] : memref<1x32xf32, #tpu.memory_space<vmem>>, vector<1x32xf32>
    %3 = vector.shape_cast %0 : vector<2x8x32xbf16> to vector<16x32xbf16>
    %cst = arith.constant dense<0.000000e+00> : vector<16x32xf32>
    %4 = tpu.matmul %3, %1, %cst {dimension_numbers = #tpu.dot_dimension_numbers<[1], [1], [0], [0], [0, 0, 1, 0], [], []>} : vector<16x32xbf16>, vector<32x32xbf16>, vector<16x32xf32> -> vector<16x32xf32>
    %5 = vector.broadcast %2 : vector<1x32xf32> to vector<16x32xf32>
    %6 = arith.addf %4, %5 : vector<16x32xf32>
    %7 = math.tanh %6 : vector<16x32xf32>
    %8 = vector.shape_cast %7 : vector<16x32xf32> to vector<2x8x32xf32>
    %cst_6 = arith.constant dense<0xFF800000> : vector<2x32xf32>
    %9 = vector.multi_reduction <maximumf>, %8, %cst_6 [1] : vector<2x8x32xf32> to vector<2x32xf32>
    %10 = vector.shape_cast %9 : vector<2x32xf32> to vector<2x1x32xf32>
    %11 = vector.broadcast %10 : vector<2x1x32xf32> to vector<2x8x32xf32>
    %12 = arith.subf %8, %11 : vector<2x8x32xf32>
    %13 = math.exp %12 : vector<2x8x32xf32>
    %cst_7 = arith.constant dense<0.000000e+00> : vector<2x32xf32>
    %14 = vector.multi_reduction <add>, %13, %cst_7 [1] : vector<2x8x32xf32> to vector<2x32xf32>
    %15 = vector.shape_cast %14 : vector<2x32xf32> to vector<2x1x32xf32>
    %16 = tpu.reciprocal %15 {approx = true} : vector<2x1x32xf32> -> vector<2x1x32xf32>
    %17 = vector.broadcast %16 : vector<2x1x32xf32> to vector<2x8x32xf32>
    %18 = arith.mulf %13, %17 : vector<2x8x32xf32>
    %19 = arith.extf %0 : vector<2x8x32xbf16> to vector<2x8x32xf32>
    %20 = arith.mulf %18, %19 : vector<2x8x32xf32>
    %cst_8 = arith.constant dense<0.000000e+00> : vector<2x8xf32>
    %21 = vector.multi_reduction <add>, %20, %cst_8 [2] : vector<2x8x32xf32> to vector<2x8xf32>
    %c0_9 = arith.constant 0 : index
    %c0_10 = arith.constant 0 : index
    %22 = vector.load %arg4[%c0_9, %c0_10] : memref<2x8xf32, #tpu.memory_space<vmem>>, vector<2x8xf32>
    tpu.vector_store %arg4[%c0_9, %c0_10], %21 {strides = array<i32>} : memref<2x8xf32, #tpu.memory_space<vmem>>, vector<2x8xf32>,
    return
  }
  func.func @transform_0(%arg0: i32) -> (i32, i32, i32) {
    %c0_i32 = arith.constant 0 : i32
    %c0_i32_0 = arith.constant 0 : i32
    %c0_i32_1 = arith.constant 0 : i32
    return %arg0, %c0_i32, %c0_i32_0 : i32, i32, i32
  }
  func.func @transform_1(%arg0: i32) -> (i32, i32) {
    %c0_i32 = arith.constant 0 : i32
    %c0_i32_0 = arith.constant 0 : i32
    %c0_i32_1 = arith.constant 0 : i32
    return %c0_i32, %c0_i32_0 : i32, i32
  }
  func.func @transform_2(%arg0: i32) -> (i32, i32) {
    %c0_i32 = arith.constant 0 : i32
    %c0_i32_0 = arith.constant 0 : i32
    %c0_i32_1 = arith.constant 0 : i32
    return %c0_i32, %c0_i32_0 : i32, i32
  }
  func.func @transform_3(%arg0: i32) -> (i32, i32) {
    %c0_i32 = arith.constant 0 : i32
    %c0_i32_0 = arith.constant 0 : i32
    return %arg0, %c0_i32 : i32, i32
  }
}

</mosaic_0001>

<llo_original>
// kernel: tpu_custom_call.1
$region0: #{tpu_custom_call.1}
  #allocation0 [shape = 'u32[]', space=smem, size = 0x4, offset = 0x4, fixed_abs, tag = 'smem constant byte address 0x4 - core index']
  #allocation1 [shape = 'u32[144,128]{1,0:T(1,128)}', space=vmem, size = 0x12000, scoped, tag = 'internal scratch']
  %s0 = inlined_call_operand.hbm [shape: bf16[2,8,32], index: 0, kind: input, shape index: {}]
  %s1 = inlined_call_operand.hbm [shape: bf16[32,32], index: 1, kind: input, shape index: {}]
  %s2 = inlined_call_operand.vmem [shape: f32[1,32], index: 2, kind: input, shape index: {}]
  %s3 = inlined_call_operand.hbm [shape: f32[2,8], index: 3, kind: output, shape index: {}]
  %s4 = sld [smem:[#allocation0]]
  $region30: #{tpu_custom_call.1} parent=0
    _
  %s6 = ssub.s32 1, %s4
  %s7 = scalar_select 0, %s6, %s4
  $region1: #{tpu_custom_call.1} parent=0
    #allocation2 [shape = 'u8[4096]{0}', space=vmem, size = 0x1000, scoped, tag = 'input window, operand 0, single buffered']
    #allocation3 [shape = 's32[1]{0}', space=sflag, size = 0x4, scoped, tag = 'scoped memory for tpu_custom_call.1']
    #allocation4 [shape = 's32[1]{0}', space=sflag, size = 0x4, scoped, tag = 'scoped memory for tpu_custom_call.1']
    #allocation5 [shape = 'u8[8192]{0}', space=vmem, size = 0x2000, scoped, tag = 'input window, operand 1, single buffered']
    #allocation6 [shape = 's32[1]{0}', space=sflag, size = 0x4, scoped, tag = 'scoped memory for tpu_custom_call.1']
    #allocation7 [shape = 'u8[1024]{0}', space=vmem, size = 0x400, scoped, tag = 'output window, operand 0, single buffered']
    %8 = vsyncpa [#allocation3], 0
    %9 = vsyncpa [#allocation6], 0
    %10 = vsyncpa [#allocation4], 0
    // Predicated region
    $region2: #{tpu_custom_call.1} parent=1 // pred_check
      _
    $region3: #{tpu_custom_call.1} parent=1 // pred_check_branch
      %12 = sbr.rel (0) target = $region5
    $region4: #{tpu_custom_call.1} parent=1 // pred_region
      %s14 = ssub.s32 128, 128
      %15 = vsyncadd [#allocation3], %s14
      %s16 = sshll.u32 [#allocation2], 4
      %s17 = int_to_ptr.vmem [resolvable:$true] %s16
      %22 = dma.hbm_to_vmem [thread:$0]  %s0, 128, %s17, [#allocation3], 64, 64, 4
    $region5: #{tpu_custom_call.1} parent=1 // pred_fallthru
      _
    // Predicated region
    $region6: #{tpu_custom_call.1} parent=1 // pred_check
      _
    $region7: #{tpu_custom_call.1} parent=1 // pred_check_branch
      %24 = sbr.rel (0) target = $region9
    $region8: #{tpu_custom_call.1} parent=1 // pred_region
      %s26 = ssub.s32 256, 256
      %27 = vsyncadd [#allocation6], %s26
      %s28 = sshll.u32 [#allocation5], 4
      %s29 = int_to_ptr.vmem [resolvable:$true] %s28
      %34 = dma.hbm_to_vmem [thread:$0]  %s1, 256, %s29, [#allocation6], 64, 64, 4
    $region9: #{tpu_custom_call.1} parent=1 // pred_fallthru
      _
    // Predicated region
    $region10: #{tpu_custom_call.1} parent=1 // pred_check
      _
    $region11: #{tpu_custom_call.1} parent=1 // pred_check_branch
      %36 = sbr.rel (0) target = $region13
    $region12: #{tpu_custom_call.1} parent=1 // pred_region
      _
    $region13: #{tpu_custom_call.1} parent=1 // pred_fallthru
      _
    // Predicated region
    $region14: #{tpu_custom_call.1} parent=1 // pred_check
      _
    $region15: #{tpu_custom_call.1} parent=1 // pred_check_branch
      %38 = sbr.rel (0) target = $region17
    $region16: #{tpu_custom_call.1} parent=1 // pred_region
      %39 = dma.done [#allocation3], 128
    $region17: #{tpu_custom_call.1} parent=1 // pred_fallthru
      _
    // Predicated region
    $region18: #{tpu_custom_call.1} parent=1 // pred_check
      _
    $region19: #{tpu_custom_call.1} parent=1 // pred_check_branch
      %41 = sbr.rel (0) target = $region21
    $region20: #{tpu_custom_call.1} parent=1 // pred_region
      %42 = dma.done [#allocation6], 256
    $region21: #{tpu_custom_call.1} parent=1 // pred_fallthru
      _
    %v44 = vld [vmem:[#allocation2] sm:$0xf]
    %v45 = vld [vmem:[#allocation2 + $0x4] sm:$0xf]
    %v46 = vld [vmem:[#allocation5] sm:$0xf]
    %v47 = vld [vmem:[#allocation5 + $0x4] sm:$0xf]
    %v48 = vld [vmem:[#allocation5 + $0x8] sm:$0xf]
    %v49 = vld [vmem:[#allocation5 + $0xc] sm:$0xf]
    %v50 = vld [vmem:[%s2] sm:$0x1]
    %v52 = vlaneseq
    %v53 = vshrl.u32 %v52, 7
    %v54 = vsub.s32 0, %v53
    %v55 = vrot.slane %v50, %v54
    %v59 = vunpack.c.l.b16 %v44
    %v60 = vunpack.c.l.b16 %v45
    %v61 = vpack.c.b16 %v60, %v59
    %v66 = vunpack.c.l.b16 %v46
    %v67 = vunpack.c.l.b16 %v47
    %v68 = vunpack.c.l.b16 %v48
    %v69 = vunpack.c.l.b16 %v49
    %v70 = vpack.c.b16 %v67, %v66
    %v71 = vpack.c.b16 %v69, %v68
    %vm72 = vcmask 261120
    %v74 = vsel %vm72, %v61, 0
    %v77 = vsel %vm72, %v70, 0
    %v80 = vsel %vm72, %v71, 0
    %82 = vmatprep.subr.bf16.mxu0 0
    %83 = vmatpush1.bf16.xpose.msra.mxu0 0
    %84 = vmatprep.subr.bf16.mxu0 0
    %85 = vmatpush1.bf16.xpose.msra.mxu0 0
    %86 = vmatprep.subr.bf16.mxu0 0
    %87 = vmatpush1.bf16.xpose.msra.mxu0 0
    %88 = vmatprep.subr.bf16.mxu0 0
    %89 = vmatpush1.bf16.xpose.msra.mxu0 0
    %90 = vmatprep.subr.bf16.mxu0 0
    %91 = vmatpush1.bf16.xpose.msra.mxu0 0
    %92 = vmatprep.subr.bf16.mxu0 0
    %93 = vmatpush1.bf16.xpose.msra.mxu0 0
    %94 = vmatprep.subr.bf16.mxu0 0
    %95 = vmatpush1.bf16.xpose.msra.mxu0 %v80
    %96 = vmatprep.subr.bf16.mxu0 0
    %97 = vmatpush1.bf16.xpose.msra.mxu0 %v77
    %98 = vmatprep.subr.bf16.mxu0 0
    %99 = vmatpush2.bf16.xpose.msra.mxu0 0
    %100 = vmatprep.subr.bf16.mxu0 0
    %101 = vmatpush2.bf16.xpose.msra.mxu0 0
    %102 = vmatprep.subr.bf16.mxu0 0
    %103 = vmatpush2.bf16.xpose.msra.mxu0 0
    %104 = vmatprep.subr.bf16.mxu0 0
    %105 = vmatpush2.bf16.xpose.msra.mxu0 0
    %106 = vmatprep.subr.bf16.mxu0 0
    %107 = vmatpush2.bf16.xpose.msra.mxu0 0
    %108 = vmatprep.subr.bf16.mxu0 0
    %109 = vmatpush2.bf16.xpose.msra.mxu0 0
    %110 = vmatprep.subr.bf16.mxu0 0
    %111 = vmatpush2.bf16.xpose.msra.mxu0 0
    %112 = vmatprep.subr.bf16.mxu0 0
    %113 = vmatpush2.bf16.xpose.msra.mxu0 0
    %114 = vmatprep.mubr.bf16.mxu0 0
    %115 = vmatmul.mubr.bf16.gmra.mxu0 %v74
    %v116 = vpop.f32.mrf.mxu0
    %v117 = vadd.f32 %v55, %v116
    %v118 = vpop.f32.mrf.mxu0
    %v119 = vpop.f32.mrf.mxu0
    %v120 = vadd.f32 %v55, %v119
    %v121 = vpop.f32.mrf.mxu0
    %122 = vdwg.mxu0
    %v123 = vtanh.pop %v117
    %v124 = vtanh.pop %v120
    %v125 = vsel %vm72, %v123, -inf
    %v126 = vrot.slane %v125, 4
    %v127 = vmax.f32 %v125, %v126
    %v128 = vrot.slane %v127, 2
    %v129 = vmax.f32 %v127, %v128
    %v130 = vrot.slane %v129, 1
    %v131 = vmax.f32 %v129, %v130
    %v132 = vsel %vm72, %v124, -inf
    %v133 = vrot.slane %v132, 4
    %v134 = vmax.f32 %v132, %v133
    %v135 = vrot.slane %v134, 2
    %v136 = vmax.f32 %v134, %v135
    %v137 = vrot.slane %v136, 1
    %v138 = vmax.f32 %v136, %v137
    %v139 = vsub.f32 %v123, %v131
    %v140 = vsub.f32 %v124, %v138
    %v141 = vmul.f32 %v139, 1.442695
    %v142 = vpow.pop %v141
    %v143 = vmul.f32 %v140, 1.442695
    %v144 = vpow.pop %v143
    %v145 = vsel %vm72, %v142, 0.0
    %v146 = vrot.slane %v145, 4
    %v147 = vadd.f32 %v145, %v146
    %v148 = vrot.slane %v147, 2
    %v149 = vadd.f32 %v147, %v148
    %v150 = vrot.slane %v149, 1
    %v151 = vadd.f32 %v149, %v150
    %v152 = vsel %vm72, %v144, 0.0
    %v153 = vrot.slane %v152, 4
    %v154 = vadd.f32 %v152, %v153
    %v155 = vrot.slane %v154, 2
    %v156 = vadd.f32 %v154, %v155
    %v157 = vrot.slane %v156, 1
    %v158 = vadd.f32 %v156, %v157
    %v159 = vrcp.pop %v151
    %v160 = vrcp.pop %v158
    %v161 = vmul.f32 %v142, %v159
    %v162 = vmul.f32 %v144, %v160
    %v163 = vunpack.c.l.bf16 %v44
    %v164 = vunpack.c.l.bf16 %v45
    %v165 = vmul.f32 %v161, %v163
    %v166 = vmul.f32 %v162, %v164
    %v167 = vsel %vm72, %v165, 0.0
    %168 = vadd.xlane.f32.xlu0 %v167
    %v169 = vpop.xlane.xlu0 %168
    %v170 = vsel %vm72, %v166, 0.0
    %171 = vadd.xlane.f32.xlu0 %v170
    %v172 = vpop.xlane.xlu0 %171
    %v175 = vlaneseq
    %v176 = vand.u32 %v175, 127
    %v177 = vlaneseq
    %v178 = vshrl.u32 %v177, 7
    %v179 = vsub.s32 %v176, %v178
    %v180 = vrot.slane %v169, %v179
    %v181 = vlaneseq
    %v182 = vshrl.u32 %v181, 7
    %v183 = vsub.s32 %v176, %v182
    %v184 = vrot.slane %v172, %v183
    %vm185 = vcmask 1041409
    %v186 = vsel %vm185, %v184, %v180
    %vm188 = vcmask 58368
    %189 = vst.msk [vmem:[#allocation7] sm:$0x3] %vm188, %v186
    // Predicated region
    $region22: #{tpu_custom_call.1} parent=1 // pred_check
      _
    $region23: #{tpu_custom_call.1} parent=1 // pred_check_branch
      %191 = sbr.rel (0) target = $region25
    $region24: #{tpu_custom_call.1} parent=1 // pred_region
      %s193 = ssub.s32 32, 32
      %194 = vsyncadd [#allocation4], %s193
      %s196 = sshll.u32 [#allocation7], 4
      %s197 = int_to_ptr.vmem [resolvable:$true] %s196
      %199 = dma.vmem_to_hbm [thread:$0]  %s197, 32, %s3, [#allocation4]
    $region25: #{tpu_custom_call.1} parent=1 // pred_fallthru
      _
    // Predicated region
    $region26: #{tpu_custom_call.1} parent=1 // pred_check
      _
    $region27: #{tpu_custom_call.1} parent=1 // pred_check_branch
      %201 = sbr.rel (0) target = $region29
    $region28: #{tpu_custom_call.1} parent=1 // pred_region
      %202 = dma.done [#allocation4], 32
    $region29: #{tpu_custom_call.1} parent=1 // pred_fallthru
      _
    %203 = vsyncpa [#allocation3], 1
    %204 = vsyncpa [#allocation6], 1
    %205 = vsyncpa [#allocation4], 1

</llo_original>
